<compile_context>
chip_gen: v7x
topology: tpu7x:2x2x1
jax: 0.10.0
libtpu: 0.0.40
codegen_flags: <defaults>
</compile_context>

<pallas_src>
import functools

import numpy as np

import jax
import jax.numpy as jnp
from jax.experimental import pallas as pl
from jax.experimental.pallas import tpu as pltpu

# ---- model hyperparameters (fixed by CNN.__init__) -------------------------
V = 50002
D = 128
KS = [1, 2, 3, 4, 5, 6]
KMAX = max(KS)
COUT = 20
N_BASE = 11
FC_IN = len(KS) * COUT + N_BASE        # 131
C_REAL = len(KS) * COUT                # 120 real conv channels
C_PAD = 128                            # lane-dense packed channel width
NEG = jnp.float32(-1e30)               # additive mask for invalid conv positions


# ---- fused Pallas kernel -----------------------------------------------------
def _fused_cnn_kernel(x_ref, w_ref, cb_ref, base_ref, mask_ref,
                      fwc_ref, fwb_ref, fb_ref, o_ref):
    """All conv branches + ReLU + time max-pool + FC in one kernel.

    x_ref:    (B, L+KMAX-1, 2D)  zero-padded embedded input
    w_ref:    (KMAX*2D, C_PAD)   packed conv weights (zero-padded taps/lanes)
    cb_ref:   (1, C_PAD)         packed conv biases
    base_ref: (B, C_PAD)         baseline features, lane-padded
    mask_ref: (L, C_PAD)         additive mask (0 valid, NEG invalid position)
    fwc_ref:  (1, C_PAD)         FC weights for conv features (lane-padded)
    fwb_ref:  (1, C_PAD)         FC weights for baseline features (lane-padded)
    fb_ref:   (1, 1)             FC bias
    o_ref:    (B, 1)
    """
    B = base_ref.shape[0]
    L = mask_ref.shape[0]

    x = x_ref[...]                                          # (B, L+KMAX-1, 2D)
    # Unfold the KMAX taps along the channel axis -> one lane-dense matmul.
    taps = [x[:, i:i + L, :] for i in range(KMAX)]          # each (B, L, 2D)
    x_unf = jnp.concatenate(taps, axis=2)                   # (B, L, KMAX*2D)
    x_unf = x_unf.reshape(B * L, KMAX * 2 * D)              # (B*L, 1536)

    # Single MXU matmul covering all six conv branches (N = 128 lanes).
    y = jnp.dot(x_unf, w_ref[...], preferred_element_type=jnp.float32)
    y = jnp.maximum(y + cb_ref[...], 0.0)                   # bias + ReLU

    # Explicitly mask invalid time positions of shorter branches, then pool.
    y = y.reshape(B, L, C_PAD) + mask_ref[...][None, :, :]
    pooled = jnp.max(y, axis=1)                             # (B, C_PAD)

    # Dropout(0.2): inference identity.  FC epilogue on resident vregs.
    conv_part = jnp.sum(pooled * fwc_ref[...], axis=1, keepdims=True)    # (B,1)
    base_part = jnp.sum(base_ref[...] * fwb_ref[...], axis=1, keepdims=True)
    o_ref[...] = conv_part + base_part + fb_ref[...]


def fused_cnn(x_pad, w_packed, cb, base_pad, time_mask, fwc, fwb, fb):
    B = base_pad.shape[0]
    vmem = pl.BlockSpec(memory_space=pltpu.MemorySpace.VMEM)
    return pl.pallas_call(
        _fused_cnn_kernel,
        out_shape=jax.ShapeDtypeStruct((B, 1), jnp.float32),
        in_specs=[vmem] * 8,
        out_specs=vmem,
    )(x_pad, w_packed, cb, base_pad, time_mask, fwc, fwb, fb)


# ---- full forward (gather / parameter packing glue in JAX, compute in Pallas)
@jax.jit
def cnn_forward(s1, s2, baseline_features, embed_table, conv_ws, conv_bs,
                fc_w, fc_b):
    B, L = s1.shape
    assert L >= KMAX, "sequence must be at least max kernel size"

    # nn.Embedding lookups + concat (gather glue, plain JAX).
    x1 = jnp.take(embed_table, s1, axis=0)                   # (B, L, D)
    x2 = jnp.take(embed_table, s2, axis=0)                   # (B, L, D)
    x = jnp.concatenate([x1, x2], axis=2)                    # (B, L, 2D)
    # Zero-pad the time axis so all branches share KMAX taps in one matmul.
    x_pad = jnp.pad(x, ((0, 0), (0, KMAX - 1), (0, 0)))      # (B, L+KMAX-1, 2D)

    # Pack conv weights/biases lane-dense: (KMAX*2D, 128), zero pad taps/lanes.
    W = jnp.zeros((KMAX, 2 * D, C_PAD), jnp.float32)
    cb = jnp.zeros((1, C_PAD), jnp.float32)
    for j, (k, w, b) in enumerate(zip(KS, conv_ws, conv_bs)):
        W = W.at[:k, :, j * COUT:(j + 1) * COUT].set(w)      # w: (k, 2D, COUT)
        cb = cb.at[0, j * COUT:(j + 1) * COUT].set(b.reshape(-1))
    W = W.reshape(KMAX * 2 * D, C_PAD)

    # Pack FC weights: conv-feature part and baseline part, lane-padded to 128.
    fwc = jnp.zeros((1, C_PAD), jnp.float32).at[0, :C_REAL].set(fc_w[:C_REAL, 0])
    fwb = jnp.zeros((1, C_PAD), jnp.float32).at[0, :N_BASE].set(fc_w[C_REAL:, 0])
    fb = fc_b.reshape(1, 1).astype(jnp.float32)

    base_pad = jnp.pad(baseline_features.astype(jnp.float32),
                       ((0, 0), (0, C_PAD - N_BASE)))        # (B, 128)

    # Additive validity mask (static): position t valid for branch k iff
    # t <= L - k.  Padded lanes (>=120) have zero weights/bias -> left valid.
    mask_np = np.zeros((L, C_PAD), np.float32)
    for j, k in enumerate(KS):
        mask_np[L - k + 1:, j * COUT:(j + 1) * COUT] = float(NEG)
    time_mask = jnp.asarray(mask_np)

    return fused_cnn(x_pad, W, cb, base_pad, time_mask, fwc, fwb, fb)


# ---- deterministic parameter / input construction ---------------------------
if __name__ == "__main__":
    B, L = 2, 8

    keys = jax.random.split(jax.random.PRNGKey(0), 18)

    # Embedding table (V, D)
    embed_table = 0.02 * jax.random.normal(keys[0], (V, D), jnp.float32)

    # Conv2d weights (Cout, 1, k, 2D) -> (k, 2D, Cout), biases (Cout,)
    conv_ws, conv_bs = [], []
    for j, k in enumerate(KS):
        w = 0.05 * jax.random.normal(keys[1 + 2 * j], (COUT, 1, k, 2 * D),
                                     jnp.float32)
        bsa = 0.05 * jax.random.normal(keys[2 + 2 * j], (COUT,), jnp.float32)
        conv_ws.append(jnp.transpose(w[:, 0], (1, 2, 0)))    # (k, 2D, Cout)
        conv_bs.append(bsa)

    # Linear(131, 1)
    fc_w = 0.05 * jax.random.normal(keys[13], (FC_IN, 1), jnp.float32)
    fc_b = 0.05 * jax.random.normal(keys[14], (1, 1), jnp.float32)

    # Inputs: token id sequences + baseline features
    s1 = jax.random.randint(keys[15], (B, L), 0, V, jnp.int32)
    s2 = jax.random.randint(keys[16], (B, L), 0, V, jnp.int32)
    baseline_features = jax.random.normal(keys[17], (B, N_BASE), jnp.float32)

    out = cnn_forward(s1, s2, baseline_features, embed_table,
                      tuple(conv_ws), tuple(conv_bs), fc_w, fc_b)
    out = jax.block_until_ready(out)
    assert out.shape == (B, 1) and out.dtype == jnp.float32
    print("KERNEL_OK")
</pallas_src>

<mosaic_0001>
module attributes {stable_mosaic.version = 11 : i64} {
  func.func @_fused_cnn_kernel(%arg0: memref<2x13x256xf32, #tpu.memory_space<vmem>>, %arg1: memref<1536x128xf32, #tpu.memory_space<vmem>>, %arg2: memref<1x128xf32, #tpu.memory_space<vmem>>, %arg3: memref<2x128xf32, #tpu.memory_space<vmem>>, %arg4: memref<8x128xf32, #tpu.memory_space<vmem>>, %arg5: memref<1x128xf32, #tpu.memory_space<vmem>>, %arg6: memref<1x128xf32, #tpu.memory_space<vmem>>, %arg7: memref<1x1xf32, #tpu.memory_space<vmem>>, %arg8: memref<2x1xf32, #tpu.memory_space<vmem>>) attributes {dimension_semantics = [], scalar_prefetch = 0 : i64, scratch_operands = 0 : i64, tpu.core_type = #tpu.core_type<tc>} {
    %c0 = arith.constant 0 : index
    %c0_0 = arith.constant 0 : index
    %c0_1 = arith.constant 0 : index
    %0 = vector.load %arg0[%c0, %c0_0, %c0_1] : memref<2x13x256xf32, #tpu.memory_space<vmem>>, vector<2x13x256xf32>
    %1 = vector.extract_strided_slice %0 {offsets = [0, 0, 0], sizes = [2, 8, 256], strides = [1, 1, 1]} : vector<2x13x256xf32> to vector<2x8x256xf32>
    %2 = vector.extract_strided_slice %0 {offsets = [0, 1, 0], sizes = [2, 8, 256], strides = [1, 1, 1]} : vector<2x13x256xf32> to vector<2x8x256xf32>
    %3 = vector.extract_strided_slice %0 {offsets = [0, 2, 0], sizes = [2, 8, 256], strides = [1, 1, 1]} : vector<2x13x256xf32> to vector<2x8x256xf32>
    %4 = vector.extract_strided_slice %0 {offsets = [0, 3, 0], sizes = [2, 8, 256], strides = [1, 1, 1]} : vector<2x13x256xf32> to vector<2x8x256xf32>
    %5 = vector.extract_strided_slice %0 {offsets = [0, 4, 0], sizes = [2, 8, 256], strides = [1, 1, 1]} : vector<2x13x256xf32> to vector<2x8x256xf32>
    %6 = vector.extract_strided_slice %0 {offsets = [0, 5, 0], sizes = [2, 8, 256], strides = [1, 1, 1]} : vector<2x13x256xf32> to vector<2x8x256xf32>
    %7 = tpu.concatenate %1, %2, %3, %4, %5, %6 in 2 : vector<2x8x256xf32>, vector<2x8x256xf32>, vector<2x8x256xf32>, vector<2x8x256xf32>, vector<2x8x256xf32>, vector<2x8x256xf32> -> vector<2x8x1536xf32>
    %8 = vector.shape_cast %7 : vector<2x8x1536xf32> to vector<16x1536xf32>
    %c0_2 = arith.constant 0 : index
    %c0_3 = arith.constant 0 : index
    %9 = vector.load %arg1[%c0_2, %c0_3] : memref<1536x128xf32, #tpu.memory_space<vmem>>, vector<1536x128xf32>
    %cst = arith.constant dense<0.000000e+00> : vector<16x128xf32>
    %10 = tpu.matmul %8, %9, %cst {dimension_numbers = #tpu.dot_dimension_numbers<[1], [0], [0], [1], [0, 0, 1, 1], [], []>} : vector<16x1536xf32>, vector<1536x128xf32>, vector<16x128xf32> -> vector<16x128xf32>
    %c0_4 = arith.constant 0 : index
    %c0_5 = arith.constant 0 : index
    %11 = vector.load %arg2[%c0_4, %c0_5] : memref<1x128xf32, #tpu.memory_space<vmem>>, vector<1x128xf32>
    %12 = vector.broadcast %11 : vector<1x128xf32> to vector<16x128xf32>
    %13 = arith.addf %10, %12 : vector<16x128xf32>
    %cst_6 = arith.constant 0.000000e+00 : f32
    %14 = vector.broadcast %cst_6 : f32 to vector<16x128xf32>
    %15 = arith.maximumf %13, %14 : vector<16x128xf32>
    %16 = vector.shape_cast %15 : vector<16x128xf32> to vector<2x8x128xf32>
    %c0_7 = arith.constant 0 : index
    %c0_8 = arith.constant 0 : index
    %17 = vector.load %arg4[%c0_7, %c0_8] : memref<8x128xf32, #tpu.memory_space<vmem>>, vector<8x128xf32>
    %18 = vector.shape_cast %17 : vector<8x128xf32> to vector<1x8x128xf32>
    %19 = vector.broadcast %18 : vector<1x8x128xf32> to vector<2x8x128xf32>
    %20 = arith.addf %16, %19 : vector<2x8x128xf32>
    %cst_9 = arith.constant dense<0xFF800000> : vector<2x128xf32>
    %21 = vector.multi_reduction <maximumf>, %20, %cst_9 [1] : vector<2x8x128xf32> to vector<2x128xf32>
    %c0_10 = arith.constant 0 : index
    %c0_11 = arith.constant 0 : index
    %22 = vector.load %arg5[%c0_10, %c0_11] : memref<1x128xf32, #tpu.memory_space<vmem>>, vector<1x128xf32>
    %23 = vector.broadcast %22 : vector<1x128xf32> to vector<2x128xf32>
    %24 = arith.mulf %21, %23 : vector<2x128xf32>
    %cst_12 = arith.constant dense<0.000000e+00> : vector<2xf32>
    %25 = vector.multi_reduction <add>, %24, %cst_12 [1] : vector<2x128xf32> to vector<2xf32>
    %26 = vector.shape_cast %25 : vector<2xf32> to vector<2x1xf32>
    %c0_13 = arith.constant 0 : index
    %c0_14 = arith.constant 0 : index
    %27 = vector.load %arg3[%c0_13, %c0_14] : memref<2x128xf32, #tpu.memory_space<vmem>>, vector<2x128xf32>
    %c0_15 = arith.constant 0 : index
    %c0_16 = arith.constant 0 : index
    %28 = vector.load %arg6[%c0_15, %c0_16] : memref<1x128xf32, #tpu.memory_space<vmem>>, vector<1x128xf32>
    %29 = vector.broadcast %28 : vector<1x128xf32> to vector<2x128xf32>
    %30 = arith.mulf %27, %29 : vector<2x128xf32>
    %cst_17 = arith.constant dense<0.000000e+00> : vector<2xf32>
    %31 = vector.multi_reduction <add>, %30, %cst_17 [1] : vector<2x128xf32> to vector<2xf32>
    %32 = vector.shape_cast %31 : vector<2xf32> to vector<2x1xf32>
    %33 = arith.addf %26, %32 : vector<2x1xf32>
    %c0_18 = arith.constant 0 : index
    %c0_19 = arith.constant 0 : index
    %34 = vector.load %arg7[%c0_18, %c0_19] : memref<1x1xf32, #tpu.memory_space<vmem>>, vector<1x1xf32>
    %35 = vector.broadcast %34 : vector<1x1xf32> to vector<2x1xf32>
    %36 = arith.addf %33, %35 : vector<2x1xf32>
    %c0_20 = arith.constant 0 : index
    %c0_21 = arith.constant 0 : index
    %37 = vector.load %arg8[%c0_20, %c0_21] : memref<2x1xf32, #tpu.memory_space<vmem>>, vector<2x1xf32>
    tpu.vector_store %arg8[%c0_20, %c0_21], %36 {strides = array<i32>} : memref<2x1xf32, #tpu.memory_space<vmem>>, vector<2x1xf32>,
    return
  }
}

</mosaic_0001>

<llo_original>
// kernel: cnn_forward.1
$region0: #{cnn_forward.1}
  #allocation0 [shape = 'u32[]', space=smem, size = 0x4, offset = 0x4, fixed_abs, tag = 'smem constant byte address 0x4 - core index']
  #allocation1 [shape = 'u32[144,128]{1,0:T(1,128)}', space=vmem, size = 0x12000, scoped, tag = 'internal scratch']
  #allocation2 [shape = 'f32[1,1]{1,0:T(1,128)S(1)}', space=vmem, size = 0x200, scoped, tag = 'scoped memory for cnn_forward.1']
  %s0 = inlined_call_operand.vmem [shape: f32[2,13,256], index: 0, kind: input, shape index: {}]
  %s1 = inlined_call_operand.vmem [shape: f32[1536,128], index: 1, kind: input, shape index: {}]
  %s2 = inlined_call_operand.vmem [shape: f32[1,128], index: 2, kind: input, shape index: {}]
  %s3 = inlined_call_operand.vmem [shape: f32[2,128], index: 3, kind: input, shape index: {}]
  %s4 = inlined_call_operand.hbm [shape: f32[8,128], index: 4, kind: input, shape index: {}]
  %s5 = inlined_call_operand.vmem [shape: f32[1,128], index: 5, kind: input, shape index: {}]
  %s6 = inlined_call_operand.vmem [shape: f32[1,128], index: 6, kind: input, shape index: {}]
  %s7 = inlined_call_operand.<no memory space> [shape: f32[1,1], index: 7, kind: input, shape index: {}]
  %s8 = inlined_call_operand.vmem [shape: f32[2,1], index: 8, kind: output, shape index: {}]
  %s9 = sld [smem:[#allocation0]]
  $region46: #{cnn_forward.1} parent=0
    _
  %s11 = ssub.s32 1, %s9
  %s12 = scalar_select 0, %s11, %s9
  %v13 = vstv %s7
  %14 = vst [vmem:[#allocation2] sm:$0x1] %v13
  $region1: #{cnn_forward.1} parent=0
    #allocation3 [shape = 'u8[4096]{0}', space=vmem, size = 0x1000, scoped, tag = 'input window, operand 4, single buffered']
    #allocation4 [shape = 's32[1]{0}', space=sflag, size = 0x4, scoped, tag = 'scoped memory for cnn_forward.1']
    %15 = vsyncpa [#allocation4], 0
    // Predicated region
    $region2: #{cnn_forward.1} parent=1 // pred_check
      _
    $region3: #{cnn_forward.1} parent=1 // pred_check_branch
      %17 = sbr.rel (0) target = $region5
    $region4: #{cnn_forward.1} parent=1 // pred_region
      _
    $region5: #{cnn_forward.1} parent=1 // pred_fallthru
      _
    // Predicated region
    $region6: #{cnn_forward.1} parent=1 // pred_check
      _
    $region7: #{cnn_forward.1} parent=1 // pred_check_branch
      %19 = sbr.rel (0) target = $region9
    $region8: #{cnn_forward.1} parent=1 // pred_region
      _
    $region9: #{cnn_forward.1} parent=1 // pred_fallthru
      _
    // Predicated region
    $region10: #{cnn_forward.1} parent=1 // pred_check
      _
    $region11: #{cnn_forward.1} parent=1 // pred_check_branch
      %21 = sbr.rel (0) target = $region13
    $region12: #{cnn_forward.1} parent=1 // pred_region
      _
    $region13: #{cnn_forward.1} parent=1 // pred_fallthru
      _
    // Predicated region
    $region14: #{cnn_forward.1} parent=1 // pred_check
      _
    $region15: #{cnn_forward.1} parent=1 // pred_check_branch
      %23 = sbr.rel (0) target = $region17
    $region16: #{cnn_forward.1} parent=1 // pred_region
      _
    $region17: #{cnn_forward.1} parent=1 // pred_fallthru
      _
    // Predicated region
    $region18: #{cnn_forward.1} parent=1 // pred_check
      _
    $region19: #{cnn_forward.1} parent=1 // pred_check_branch
      %25 = sbr.rel (0) target = $region21
    $region20: #{cnn_forward.1} parent=1 // pred_region
      %s27 = ssub.s32 128, 128
      %28 = vsyncadd [#allocation4], %s27
      %s30 = sshll.u32 [#allocation3], 4
      %s31 = int_to_ptr.vmem [resolvable:$true] %s30
      %33 = dma.hbm_to_vmem [thread:$0]  %s4, 128, %s31, [#allocation4]
    $region21: #{cnn_forward.1} parent=1 // pred_fallthru
      _
    // Predicated region
    $region22: #{cnn_forward.1} parent=1 // pred_check
      _
    $region23: #{cnn_forward.1} parent=1 // pred_check_branch
      %35 = sbr.rel (0) target = $region25
    $region24: #{cnn_forward.1} parent=1 // pred_region
      _
    $region25: #{cnn_forward.1} parent=1 // pred_fallthru
      _
    // Predicated region
    $region26: #{cnn_forward.1} parent=1 // pred_check
      _
    $region27: #{cnn_forward.1} parent=1 // pred_check_branch
      %37 = sbr.rel (0) target = $region29
    $region28: #{cnn_forward.1} parent=1 // pred_region
      _
    $region29: #{cnn_forward.1} parent=1 // pred_fallthru
      _
    // Predicated region
    $region30: #{cnn_forward.1} parent=1 // pred_check
      _
    $region31: #{cnn_forward.1} parent=1 // pred_check_branch
      %39 = sbr.rel (0) target = $region33
    $region32: #{cnn_forward.1} parent=1 // pred_region
      _
    $region33: #{cnn_forward.1} parent=1 // pred_fallthru
      _
    // Predicated region
    $region34: #{cnn_forward.1} parent=1 // pred_check
      _
    $region35: #{cnn_forward.1} parent=1 // pred_check_branch
      %41 = sbr.rel (0) target = $region37
    $region36: #{cnn_forward.1} parent=1 // pred_region
      %42 = dma.done [#allocation4], 128
    $region37: #{cnn_forward.1} parent=1 // pred_fallthru
      _
    %v43 = vld [vmem:[%s0] sm:$0xff]
    %v44 = vld [vmem:[%s0 + $0x8] sm:$0xff]
    %v45 = vld [vmem:[%s0 + $0x10] sm:$0x1f]
    %v46 = vld [vmem:[%s0 + $0x18] sm:$0x1f]
    %v47 = vld [vmem:[%s0 + $0x20] sm:$0xff]
    %v48 = vld [vmem:[%s0 + $0x28] sm:$0xff]
    %v49 = vld [vmem:[%s0 + $0x30] sm:$0x1f]
    %v50 = vld [vmem:[%s0 + $0x38] sm:$0x1f]
    %vm59 = vcmask 1046528
    %v60 = vrot.slane %v43, 1
    %v61 = vrot.slane %v45, 1
    %v62 = vsel %vm59, %v60, %v61
    %v63 = vrot.slane %v44, 1
    %v64 = vrot.slane %v46, 1
    %v65 = vsel %vm59, %v63, %v64
    %v66 = vrot.slane %v47, 1
    %v67 = vrot.slane %v49, 1
    %v68 = vsel %vm59, %v66, %v67
    %v69 = vrot.slane %v48, 1
    %v70 = vrot.slane %v50, 1
    %v71 = vsel %vm59, %v69, %v70
    %vm76 = vcmask 1045504
    %v77 = vrot.slane %v43, 2
    %v78 = vrot.slane %v45, 2
    %v79 = vsel %vm76, %v77, %v78
    %v80 = vrot.slane %v44, 2
    %v81 = vrot.slane %v46, 2
    %v82 = vsel %vm76, %v80, %v81
    %v83 = vrot.slane %v47, 2
    %v84 = vrot.slane %v49, 2
    %v85 = vsel %vm76, %v83, %v84
    %v86 = vrot.slane %v48, 2
    %v87 = vrot.slane %v50, 2
    %v88 = vsel %vm76, %v86, %v87
    %vm93 = vcmask 1044480
    %v94 = vrot.slane %v43, 3
    %v95 = vrot.slane %v45, 3
    %v96 = vsel %vm93, %v94, %v95
    %v97 = vrot.slane %v44, 3
    %v98 = vrot.slane %v46, 3
    %v99 = vsel %vm93, %v97, %v98
    %v100 = vrot.slane %v47, 3
    %v101 = vrot.slane %v49, 3
    %v102 = vsel %vm93, %v100, %v101
    %v103 = vrot.slane %v48, 3
    %v104 = vrot.slane %v50, 3
    %v105 = vsel %vm93, %v103, %v104
    %vm110 = vcmask 1043456
    %v111 = vrot.slane %v43, 4
    %v112 = vrot.slane %v45, 4
    %v113 = vsel %vm110, %v111, %v112
    %v114 = vrot.slane %v44, 4
    %v115 = vrot.slane %v46, 4
    %v116 = vsel %vm110, %v114, %v115
    %v117 = vrot.slane %v47, 4
    %v118 = vrot.slane %v49, 4
    %v119 = vsel %vm110, %v117, %v118
    %v120 = vrot.slane %v48, 4
    %v121 = vrot.slane %v50, 4
    %v122 = vsel %vm110, %v120, %v121
    %vm127 = vcmask 1042432
    %v128 = vrot.slane %v43, 5
    %v129 = vrot.slane %v45, 5
    %v130 = vsel %vm127, %v128, %v129
    %v131 = vrot.slane %v44, 5
    %v132 = vrot.slane %v46, 5
    %v133 = vsel %vm127, %v131, %v132
    %v134 = vrot.slane %v47, 5
    %v135 = vrot.slane %v49, 5
    %v136 = vsel %vm127, %v134, %v135
    %v137 = vrot.slane %v48, 5
    %v138 = vrot.slane %v50, 5
    %v139 = vsel %vm127, %v137, %v138
    %v144 = vld [vmem:[%s1] sm:$0xff]
    %v145 = vld [vmem:[%s1 + $0x8] sm:$0xff]
    %v146 = vld [vmem:[%s1 + $0x10] sm:$0xff]
    %v147 = vld [vmem:[%s1 + $0x18] sm:$0xff]
    %v148 = vld [vmem:[%s1 + $0x20] sm:$0xff]
    %v149 = vld [vmem:[%s1 + $0x28] sm:$0xff]
    %v150 = vld [vmem:[%s1 + $0x30] sm:$0xff]
    %v151 = vld [vmem:[%s1 + $0x38] sm:$0xff]
    %v152 = vld [vmem:[%s1 + $0x40] sm:$0xff]
    %v153 = vld [vmem:[%s1 + $0x48] sm:$0xff]
    %v154 = vld [vmem:[%s1 + $0x50] sm:$0xff]
    %v155 = vld [vmem:[%s1 + $0x58] sm:$0xff]
    %v156 = vld [vmem:[%s1 + $0x60] sm:$0xff]
    %v157 = vld [vmem:[%s1 + $0x68] sm:$0xff]
    %v158 = vld [vmem:[%s1 + $0x70] sm:$0xff]
    %v159 = vld [vmem:[%s1 + $0x78] sm:$0xff]
    %v160 = vld [vmem:[%s1 + $0x80] sm:$0xff]
    %v161 = vld [vmem:[%s1 + $0x88] sm:$0xff]
    %v162 = vld [vmem:[%s1 + $0x90] sm:$0xff]
    %v163 = vld [vmem:[%s1 + $0x98] sm:$0xff]
    %v164 = vld [vmem:[%s1 + $0xa0] sm:$0xff]
    %v165 = vld [vmem:[%s1 + $0xa8] sm:$0xff]
    %v166 = vld [vmem:[%s1 + $0xb0] sm:$0xff]
    %v167 = vld [vmem:[%s1 + $0xb8] sm:$0xff]
    %v168 = vld [vmem:[%s1 + $0xc0] sm:$0xff]
    %v169 = vld [vmem:[%s1 + $0xc8] sm:$0xff]
    %v170 = vld [vmem:[%s1 + $0xd0] sm:$0xff]
    %v171 = vld [vmem:[%s1 + $0xd8] sm:$0xff]
    %v172 = vld [vmem:[%s1 + $0xe0] sm:$0xff]
    %v173 = vld [vmem:[%s1 + $0xe8] sm:$0xff]
    %v174 = vld [vmem:[%s1 + $0xf0] sm:$0xff]
    %v175 = vld [vmem:[%s1 + $0xf8] sm:$0xff]
    %v176 = vld [vmem:[%s1 + $0x100] sm:$0xff]
    %v177 = vld [vmem:[%s1 + $0x108] sm:$0xff]
    %v178 = vld [vmem:[%s1 + $0x110] sm:$0xff]
    %v179 = vld [vmem:[%s1 + $0x118] sm:$0xff]
    %v180 = vld [vmem:[%s1 + $0x120] sm:$0xff]
    %v181 = vld [vmem:[%s1 + $0x128] sm:$0xff]
    %v182 = vld [vmem:[%s1 + $0x130] sm:$0xff]
    %v183 = vld [vmem:[%s1 + $0x138] sm:$0xff]
    %v184 = vld [vmem:[%s1 + $0x140] sm:$0xff]
    %v185 = vld [vmem:[%s1 + $0x148] sm:$0xff]
    %v186 = vld [vmem:[%s1 + $0x150] sm:$0xff]
    %v187 = vld [vmem:[%s1 + $0x158] sm:$0xff]
    %v188 = vld [vmem:[%s1 + $0x160] sm:$0xff]
    %v189 = vld [vmem:[%s1 + $0x168] sm:$0xff]
    %v190 = vld [vmem:[%s1 + $0x170] sm:$0xff]
    %v191 = vld [vmem:[%s1 + $0x178] sm:$0xff]
    %v192 = vld [vmem:[%s1 + $0x180] sm:$0xff]
    %v193 = vld [vmem:[%s1 + $0x188] sm:$0xff]
    %v194 = vld [vmem:[%s1 + $0x190] sm:$0xff]
    %v195 = vld [vmem:[%s1 + $0x198] sm:$0xff]
    %v196 = vld [vmem:[%s1 + $0x1a0] sm:$0xff]
    %v197 = vld [vmem:[%s1 + $0x1a8] sm:$0xff]
    %v198 = vld [vmem:[%s1 + $0x1b0] sm:$0xff]
    %v199 = vld [vmem:[%s1 + $0x1b8] sm:$0xff]
    %v200 = vld [vmem:[%s1 + $0x1c0] sm:$0xff]
    %v201 = vld [vmem:[%s1 + $0x1c8] sm:$0xff]
    %v202 = vld [vmem:[%s1 + $0x1d0] sm:$0xff]
    %v203 = vld [vmem:[%s1 + $0x1d8] sm:$0xff]
    %v204 = vld [vmem:[%s1 + $0x1e0] sm:$0xff]
    %v205 = vld [vmem:[%s1 + $0x1e8] sm:$0xff]
    %v206 = vld [vmem:[%s1 + $0x1f0] sm:$0xff]
    %v207 = vld [vmem:[%s1 + $0x1f8] sm:$0xff]
    %v208 = vld [vmem:[%s1 + $0x200] sm:$0xff]
    %v209 = vld [vmem:[%s1 + $0x208] sm:$0xff]
    %v210 = vld [vmem:[%s1 + $0x210] sm:$0xff]
    %v211 = vld [vmem:[%s1 + $0x218] sm:$0xff]
    %v212 = vld [vmem:[%s1 + $0x220] sm:$0xff]
    %v213 = vld [vmem:[%s1 + $0x228] sm:$0xff]
    %v214 = vld [vmem:[%s1 + $0x230] sm:$0xff]
    %v215 = vld [vmem:[%s1 + $0x238] sm:$0xff]
    %v216 = vld [vmem:[%s1 + $0x240] sm:$0xff]
    %v217 = vld [vmem:[%s1 + $0x248] sm:$0xff]
    %v218 = vld [vmem:[%s1 + $0x250] sm:$0xff]
    %v219 = vld [vmem:[%s1 + $0x258] sm:$0xff]
    %v220 = vld [vmem:[%s1 + $0x260] sm:$0xff]
    %v221 = vld [vmem:[%s1 + $0x268] sm:$0xff]
    %v222 = vld [vmem:[%s1 + $0x270] sm:$0xff]
    %v223 = vld [vmem:[%s1 + $0x278] sm:$0xff]
    %v224 = vld [vmem:[%s1 + $0x280] sm:$0xff]
    %v225 = vld [vmem:[%s1 + $0x288] sm:$0xff]
    %v226 = vld [vmem:[%s1 + $0x290] sm:$0xff]
    %v227 = vld [vmem:[%s1 + $0x298] sm:$0xff]
    %v228 = vld [vmem:[%s1 + $0x2a0] sm:$0xff]
    %v229 = vld [vmem:[%s1 + $0x2a8] sm:$0xff]
    %v230 = vld [vmem:[%s1 + $0x2b0] sm:$0xff]
    %v231 = vld [vmem:[%s1 + $0x2b8] sm:$0xff]
    %v232 = vld [vmem:[%s1 + $0x2c0] sm:$0xff]
    %v233 = vld [vmem:[%s1 + $0x2c8] sm:$0xff]
    %v234 = vld [vmem:[%s1 + $0x2d0] sm:$0xff]
    %v235 = vld [vmem:[%s1 + $0x2d8] sm:$0xff]
    %v236 = vld [vmem:[%s1 + $0x2e0] sm:$0xff]
    %v237 = vld [vmem:[%s1 + $0x2e8] sm:$0xff]
    %v238 = vld [vmem:[%s1 + $0x2f0] sm:$0xff]
    %v239 = vld [vmem:[%s1 + $0x2f8] sm:$0xff]
    %v240 = vld [vmem:[%s1 + $0x300] sm:$0xff]
    %v241 = vld [vmem:[%s1 + $0x308] sm:$0xff]
    %v242 = vld [vmem:[%s1 + $0x310] sm:$0xff]
    %v243 = vld [vmem:[%s1 + $0x318] sm:$0xff]
    %v244 = vld [vmem:[%s1 + $0x320] sm:$0xff]
    %v245 = vld [vmem:[%s1 + $0x328] sm:$0xff]
    %v246 = vld [vmem:[%s1 + $0x330] sm:$0xff]
    %v247 = vld [vmem:[%s1 + $0x338] sm:$0xff]
    %v248 = vld [vmem:[%s1 + $0x340] sm:$0xff]
    %v249 = vld [vmem:[%s1 + $0x348] sm:$0xff]
    %v250 = vld [vmem:[%s1 + $0x350] sm:$0xff]
    %v251 = vld [vmem:[%s1 + $0x358] sm:$0xff]
    %v252 = vld [vmem:[%s1 + $0x360] sm:$0xff]
    %v253 = vld [vmem:[%s1 + $0x368] sm:$0xff]
    %v254 = vld [vmem:[%s1 + $0x370] sm:$0xff]
    %v255 = vld [vmem:[%s1 + $0x378] sm:$0xff]
    %v256 = vld [vmem:[%s1 + $0x380] sm:$0xff]
    %v257 = vld [vmem:[%s1 + $0x388] sm:$0xff]
    %v258 = vld [vmem:[%s1 + $0x390] sm:$0xff]
    %v259 = vld [vmem:[%s1 + $0x398] sm:$0xff]
    %v260 = vld [vmem:[%s1 + $0x3a0] sm:$0xff]
    %v261 = vld [vmem:[%s1 + $0x3a8] sm:$0xff]
    %v262 = vld [vmem:[%s1 + $0x3b0] sm:$0xff]
    %v263 = vld [vmem:[%s1 + $0x3b8] sm:$0xff]
    %v264 = vld [vmem:[%s1 + $0x3c0] sm:$0xff]
    %v265 = vld [vmem:[%s1 + $0x3c8] sm:$0xff]
    %v266 = vld [vmem:[%s1 + $0x3d0] sm:$0xff]
    %v267 = vld [vmem:[%s1 + $0x3d8] sm:$0xff]
    %v268 = vld [vmem:[%s1 + $0x3e0] sm:$0xff]
    %v269 = vld [vmem:[%s1 + $0x3e8] sm:$0xff]
    %v270 = vld [vmem:[%s1 + $0x3f0] sm:$0xff]
    %v271 = vld [vmem:[%s1 + $0x3f8] sm:$0xff]
    %v272 = vld [vmem:[%s1 + $0x400] sm:$0xff]
    %v273 = vld [vmem:[%s1 + $0x408] sm:$0xff]
    %v274 = vld [vmem:[%s1 + $0x410] sm:$0xff]
    %v275 = vld [vmem:[%s1 + $0x418] sm:$0xff]
    %v276 = vld [vmem:[%s1 + $0x420] sm:$0xff]
    %v277 = vld [vmem:[%s1 + $0x428] sm:$0xff]
    %v278 = vld [vmem:[%s1 + $0x430] sm:$0xff]
    %v279 = vld [vmem:[%s1 + $0x438] sm:$0xff]
    %v280 = vld [vmem:[%s1 + $0x440] sm:$0xff]
    %v281 = vld [vmem:[%s1 + $0x448] sm:$0xff]
    %v282 = vld [vmem:[%s1 + $0x450] sm:$0xff]
    %v283 = vld [vmem:[%s1 + $0x458] sm:$0xff]
    %v284 = vld [vmem:[%s1 + $0x460] sm:$0xff]
    %v285 = vld [vmem:[%s1 + $0x468] sm:$0xff]
    %v286 = vld [vmem:[%s1 + $0x470] sm:$0xff]
    %v287 = vld [vmem:[%s1 + $0x478] sm:$0xff]
    %v288 = vld [vmem:[%s1 + $0x480] sm:$0xff]
    %v289 = vld [vmem:[%s1 + $0x488] sm:$0xff]
    %v290 = vld [vmem:[%s1 + $0x490] sm:$0xff]
    %v291 = vld [vmem:[%s1 + $0x498] sm:$0xff]
    %v292 = vld [vmem:[%s1 + $0x4a0] sm:$0xff]
    %v293 = vld [vmem:[%s1 + $0x4a8] sm:$0xff]
    %v294 = vld [vmem:[%s1 + $0x4b0] sm:$0xff]
    %v295 = vld [vmem:[%s1 + $0x4b8] sm:$0xff]
    %v296 = vld [vmem:[%s1 + $0x4c0] sm:$0xff]
    %v297 = vld [vmem:[%s1 + $0x4c8] sm:$0xff]
    %v298 = vld [vmem:[%s1 + $0x4d0] sm:$0xff]
    %v299 = vld [vmem:[%s1 + $0x4d8] sm:$0xff]
    %v300 = vld [vmem:[%s1 + $0x4e0] sm:$0xff]
    %v301 = vld [vmem:[%s1 + $0x4e8] sm:$0xff]
    %v302 = vld [vmem:[%s1 + $0x4f0] sm:$0xff]
    %v303 = vld [vmem:[%s1 + $0x4f8] sm:$0xff]
    %v304 = vld [vmem:[%s1 + $0x500] sm:$0xff]
    %v305 = vld [vmem:[%s1 + $0x508] sm:$0xff]
    %v306 = vld [vmem:[%s1 + $0x510] sm:$0xff]
    %v307 = vld [vmem:[%s1 + $0x518] sm:$0xff]
    %v308 = vld [vmem:[%s1 + $0x520] sm:$0xff]
    %v309 = vld [vmem:[%s1 + $0x528] sm:$0xff]
    %v310 = vld [vmem:[%s1 + $0x530] sm:$0xff]
    %v311 = vld [vmem:[%s1 + $0x538] sm:$0xff]
    %v312 = vld [vmem:[%s1 + $0x540] sm:$0xff]
    %v313 = vld [vmem:[%s1 + $0x548] sm:$0xff]
    %v314 = vld [vmem:[%s1 + $0x550] sm:$0xff]
    %v315 = vld [vmem:[%s1 + $0x558] sm:$0xff]
    %v316 = vld [vmem:[%s1 + $0x560] sm:$0xff]
    %v317 = vld [vmem:[%s1 + $0x568] sm:$0xff]
    %v318 = vld [vmem:[%s1 + $0x570] sm:$0xff]
    %v319 = vld [vmem:[%s1 + $0x578] sm:$0xff]
    %v320 = vld [vmem:[%s1 + $0x580] sm:$0xff]
    %v321 = vld [vmem:[%s1 + $0x588] sm:$0xff]
    %v322 = vld [vmem:[%s1 + $0x590] sm:$0xff]
    %v323 = vld [vmem:[%s1 + $0x598] sm:$0xff]
    %v324 = vld [vmem:[%s1 + $0x5a0] sm:$0xff]
    %v325 = vld [vmem:[%s1 + $0x5a8] sm:$0xff]
    %v326 = vld [vmem:[%s1 + $0x5b0] sm:$0xff]
    %v327 = vld [vmem:[%s1 + $0x5b8] sm:$0xff]
    %v328 = vld [vmem:[%s1 + $0x5c0] sm:$0xff]
    %v329 = vld [vmem:[%s1 + $0x5c8] sm:$0xff]
    %v330 = vld [vmem:[%s1 + $0x5d0] sm:$0xff]
    %v331 = vld [vmem:[%s1 + $0x5d8] sm:$0xff]
    %v332 = vld [vmem:[%s1 + $0x5e0] sm:$0xff]
    %v333 = vld [vmem:[%s1 + $0x5e8] sm:$0xff]
    %v334 = vld [vmem:[%s1 + $0x5f0] sm:$0xff]
    %v335 = vld [vmem:[%s1 + $0x5f8] sm:$0xff]
    %v336 = vld [vmem:[%s2] sm:$0x1]
    %v338 = vlaneseq
    %v339 = vshrl.u32 %v338, 7
    %v340 = vsub.s32 0, %v339
    %v341 = vrot.slane %v336, %v340
    %343 = vmatprep.subr.mxu0 0.0
    %344 = vmatpush1.msra.mxu0 %v144
    %345 = vmatprep.subr.mxu0 0.0
    %346 = vmatpush1.msra.mxu0 %v145
    %347 = vmatprep.subr.mxu0 0.0
    %348 = vmatpush1.msra.mxu0 %v146
    %349 = vmatprep.subr.mxu0 0.0
    %350 = vmatpush1.msra.mxu0 %v147
    %351 = vmatprep.subr.mxu0 0.0
    %352 = vmatpush1.msra.mxu0 %v148
    %353 = vmatprep.subr.mxu0 0.0
    %354 = vmatpush1.msra.mxu0 %v149
    %355 = vmatprep.subr.mxu0 0.0
    %356 = vmatpush1.msra.mxu0 %v150
    %357 = vmatprep.subr.mxu0 0.0
    %358 = vmatpush1.msra.mxu0 %v151
    %359 = vmatprep.subr.mxu0 0.0
    %360 = vmatpush1.msra.mxu0 %v152
    %361 = vmatprep.subr.mxu0 0.0
    %362 = vmatpush1.msra.mxu0 %v153
    %363 = vmatprep.subr.mxu0 0.0
    %364 = vmatpush1.msra.mxu0 %v154
    %365 = vmatprep.subr.mxu0 0.0
    %366 = vmatpush1.msra.mxu0 %v155
    %367 = vmatprep.subr.mxu0 0.0
    %368 = vmatpush1.msra.mxu0 %v156
    %369 = vmatprep.subr.mxu0 0.0
    %370 = vmatpush1.msra.mxu0 %v157
    %371 = vmatprep.subr.mxu0 0.0
    %372 = vmatpush1.msra.mxu0 %v158
    %373 = vmatprep.subr.mxu0 0.0
    %374 = vmatpush1.msra.mxu0 %v159
    %375 = vmatprep.subr.mxu0 0.0
    %376 = vmatpush1.msra.mxu0 %v160
    %377 = vmatprep.subr.mxu0 0.0
    %378 = vmatpush1.msra.mxu0 %v161
    %379 = vmatprep.subr.mxu0 0.0
    %380 = vmatpush1.msra.mxu0 %v162
    %381 = vmatprep.subr.mxu0 0.0
    %382 = vmatpush1.msra.mxu0 %v163
    %383 = vmatprep.subr.mxu0 0.0
    %384 = vmatpush1.msra.mxu0 %v164
    %385 = vmatprep.subr.mxu0 0.0
    %386 = vmatpush1.msra.mxu0 %v165
    %387 = vmatprep.subr.mxu0 0.0
    %388 = vmatpush1.msra.mxu0 %v166
    %389 = vmatprep.subr.mxu0 0.0
    %390 = vmatpush1.msra.mxu0 %v167
    %391 = vmatprep.subr.mxu0 0.0
    %392 = vmatpush1.msra.mxu0 %v168
    %393 = vmatprep.subr.mxu0 0.0
    %394 = vmatpush1.msra.mxu0 %v169
    %395 = vmatprep.subr.mxu0 0.0
    %396 = vmatpush1.msra.mxu0 %v170
    %397 = vmatprep.subr.mxu0 0.0
    %398 = vmatpush1.msra.mxu0 %v171
    %399 = vmatprep.subr.mxu0 0.0
    %400 = vmatpush1.msra.mxu0 %v172
    %401 = vmatprep.subr.mxu0 0.0
    %402 = vmatpush1.msra.mxu0 %v173
    %403 = vmatprep.subr.mxu0 0.0
    %404 = vmatpush1.msra.mxu0 %v174
    %405 = vmatprep.subr.mxu0 0.0
    %406 = vmatpush1.msra.mxu0 %v175
    %407 = vmatprep.mubr.f32.mxu0 %v44
    %408 = vmatmul.mubr.f32.gmra.mrb[0].mxu0 %v43
    %v409 = vpop.f32.mrb[0].mxu0
    %v410 = vadd.f32 %v341, %v409
    %v411 = vpop.f32.mrb[0].mxu0
    %412 = vmatprep.mubr.f32.mxu0 %v48
    %413 = vmatmul.mubr.f32.gmra.mrb[0].mxu0 %v47
    %v414 = vpop.f32.mrb[0].mxu0
    %v415 = vadd.f32 %v341, %v414
    %v416 = vpop.f32.mrb[0].mxu0
    %417 = vdwg.mxu0
    %418 = vmatprep.subr.mxu0 0.0
    %419 = vmatpush1.msra.mxu0 %v176
    %420 = vmatprep.subr.mxu0 0.0
    %421 = vmatpush1.msra.mxu0 %v177
    %422 = vmatprep.subr.mxu0 0.0
    %423 = vmatpush1.msra.mxu0 %v178
    %424 = vmatprep.subr.mxu0 0.0
    %425 = vmatpush1.msra.mxu0 %v179
    %426 = vmatprep.subr.mxu0 0.0
    %427 = vmatpush1.msra.mxu0 %v180
    %428 = vmatprep.subr.mxu0 0.0
    %429 = vmatpush1.msra.mxu0 %v181
    %430 = vmatprep.subr.mxu0 0.0
    %431 = vmatpush1.msra.mxu0 %v182
    %432 = vmatprep.subr.mxu0 0.0
    %433 = vmatpush1.msra.mxu0 %v183
    %434 = vmatprep.subr.mxu0 0.0
    %435 = vmatpush1.msra.mxu0 %v184
    %436 = vmatprep.subr.mxu0 0.0
    %437 = vmatpush1.msra.mxu0 %v185
    %438 = vmatprep.subr.mxu0 0.0
    %439 = vmatpush1.msra.mxu0 %v186
    %440 = vmatprep.subr.mxu0 0.0
    %441 = vmatpush1.msra.mxu0 %v187
    %442 = vmatprep.subr.mxu0 0.0
    %443 = vmatpush1.msra.mxu0 %v188
    %444 = vmatprep.subr.mxu0 0.0
    %445 = vmatpush1.msra.mxu0 %v189
    %446 = vmatprep.subr.mxu0 0.0
    %447 = vmatpush1.msra.mxu0 %v190
    %448 = vmatprep.subr.mxu0 0.0
    %449 = vmatpush1.msra.mxu0 %v191
    %450 = vmatprep.subr.mxu0 0.0
    %451 = vmatpush1.msra.mxu0 %v192
    %452 = vmatprep.subr.mxu0 0.0
    %453 = vmatpush1.msra.mxu0 %v193
    %454 = vmatprep.subr.mxu0 0.0
    %455 = vmatpush1.msra.mxu0 %v194
    %456 = vmatprep.subr.mxu0 0.0
    %457 = vmatpush1.msra.mxu0 %v195
    %458 = vmatprep.subr.mxu0 0.0
    %459 = vmatpush1.msra.mxu0 %v196
    %460 = vmatprep.subr.mxu0 0.0
    %461 = vmatpush1.msra.mxu0 %v197
    %462 = vmatprep.subr.mxu0 0.0
    %463 = vmatpush1.msra.mxu0 %v198
    %464 = vmatprep.subr.mxu0 0.0
    %465 = vmatpush1.msra.mxu0 %v199
    %466 = vmatprep.subr.mxu0 0.0
    %467 = vmatpush1.msra.mxu0 %v200
    %468 = vmatprep.subr.mxu0 0.0
    %469 = vmatpush1.msra.mxu0 %v201
    %470 = vmatprep.subr.mxu0 0.0
    %471 = vmatpush1.msra.mxu0 %v202
    %472 = vmatprep.subr.mxu0 0.0
    %473 = vmatpush1.msra.mxu0 %v203
    %474 = vmatprep.subr.mxu0 0.0
    %475 = vmatpush1.msra.mxu0 %v204
    %476 = vmatprep.subr.mxu0 0.0
    %477 = vmatpush1.msra.mxu0 %v205
    %478 = vmatprep.subr.mxu0 0.0
    %479 = vmatpush1.msra.mxu0 %v206
    %480 = vmatprep.subr.mxu0 0.0
    %481 = vmatpush1.msra.mxu0 %v207
    %482 = vmatprep.mubr.f32.mxu0 %v65
    %483 = vmatmul.mubr.f32.gmra.mrb[0].mxu0 %v62
    %v484 = vpop.f32.mrb[0].mxu0
    %v485 = vadd.f32 %v410, %v484
    %v486 = vpop.f32.mrb[0].mxu0
    %487 = vmatprep.mubr.f32.mxu0 %v71
    %488 = vmatmul.mubr.f32.gmra.mrb[0].mxu0 %v68
    %v489 = vpop.f32.mrb[0].mxu0
    %v490 = vadd.f32 %v415, %v489
    %v491 = vpop.f32.mrb[0].mxu0
    %492 = vdwg.mxu0
    %493 = vmatprep.subr.mxu0 0.0
    %494 = vmatpush1.msra.mxu0 %v208
    %495 = vmatprep.subr.mxu0 0.0
    %496 = vmatpush1.msra.mxu0 %v209
    %497 = vmatprep.subr.mxu0 0.0
    %498 = vmatpush1.msra.mxu0 %v210
    %499 = vmatprep.subr.mxu0 0.0
    %500 = vmatpush1.msra.mxu0 %v211
    %501 = vmatprep.subr.mxu0 0.0
    %502 = vmatpush1.msra.mxu0 %v212
    %503 = vmatprep.subr.mxu0 0.0
    %504 = vmatpush1.msra.mxu0 %v213
    %505 = vmatprep.subr.mxu0 0.0
    %506 = vmatpush1.msra.mxu0 %v214
    %507 = vmatprep.subr.mxu0 0.0
    %508 = vmatpush1.msra.mxu0 %v215
    %509 = vmatprep.subr.mxu0 0.0
    %510 = vmatpush1.msra.mxu0 %v216
    %511 = vmatprep.subr.mxu0 0.0
    %512 = vmatpush1.msra.mxu0 %v217
    %513 = vmatprep.subr.mxu0 0.0
    %514 = vmatpush1.msra.mxu0 %v218
    %515 = vmatprep.subr.mxu0 0.0
    %516 = vmatpush1.msra.mxu0 %v219
    %517 = vmatprep.subr.mxu0 0.0
    %518 = vmatpush1.msra.mxu0 %v220
    %519 = vmatprep.subr.mxu0 0.0
    %520 = vmatpush1.msra.mxu0 %v221
    %521 = vmatprep.subr.mxu0 0.0
    %522 = vmatpush1.msra.mxu0 %v222
    %523 = vmatprep.subr.mxu0 0.0
    %524 = vmatpush1.msra.mxu0 %v223
    %525 = vmatprep.subr.mxu0 0.0
    %526 = vmatpush1.msra.mxu0 %v224
    %527 = vmatprep.subr.mxu0 0.0
    %528 = vmatpush1.msra.mxu0 %v225
    %529 = vmatprep.subr.mxu0 0.0
    %530 = vmatpush1.msra.mxu0 %v226
    %531 = vmatprep.subr.mxu0 0.0
    %532 = vmatpush1.msra.mxu0 %v227
    %533 = vmatprep.subr.mxu0 0.0
    %534 = vmatpush1.msra.mxu0 %v228
    %535 = vmatprep.subr.mxu0 0.0
    %536 = vmatpush1.msra.mxu0 %v229
    %537 = vmatprep.subr.mxu0 0.0
    %538 = vmatpush1.msra.mxu0 %v230
    %539 = vmatprep.subr.mxu0 0.0
    %540 = vmatpush1.msra.mxu0 %v231
    %541 = vmatprep.subr.mxu0 0.0
    %542 = vmatpush1.msra.mxu0 %v232
    %543 = vmatprep.subr.mxu0 0.0
    %544 = vmatpush1.msra.mxu0 %v233
    %545 = vmatprep.subr.mxu0 0.0
    %546 = vmatpush1.msra.mxu0 %v234
    %547 = vmatprep.subr.mxu0 0.0
    %548 = vmatpush1.msra.mxu0 %v235
    %549 = vmatprep.subr.mxu0 0.0
    %550 = vmatpush1.msra.mxu0 %v236
    %551 = vmatprep.subr.mxu0 0.0
    %552 = vmatpush1.msra.mxu0 %v237
    %553 = vmatprep.subr.mxu0 0.0
    %554 = vmatpush1.msra.mxu0 %v238
    %555 = vmatprep.subr.mxu0 0.0
    %556 = vmatpush1.msra.mxu0 %v239
    %557 = vmatprep.mubr.f32.mxu0 %v82
    %558 = vmatmul.mubr.f32.gmra.mrb[0].mxu0 %v79
    %v559 = vpop.f32.mrb[0].mxu0
    %v560 = vadd.f32 %v485, %v559
    %v561 = vpop.f32.mrb[0].mxu0
    %562 = vmatprep.mubr.f32.mxu0 %v88
    %563 = vmatmul.mubr.f32.gmra.mrb[0].mxu0 %v85
    %v564 = vpop.f32.mrb[0].mxu0
    %v565 = vadd.f32 %v490, %v564
    %v566 = vpop.f32.mrb[0].mxu0
    %567 = vdwg.mxu0
    %568 = vmatprep.subr.mxu0 0.0
    %569 = vmatpush1.msra.mxu0 %v240
    %570 = vmatprep.subr.mxu0 0.0
    %571 = vmatpush1.msra.mxu0 %v241
    %572 = vmatprep.subr.mxu0 0.0
    %573 = vmatpush1.msra.mxu0 %v242
    %574 = vmatprep.subr.mxu0 0.0
    %575 = vmatpush1.msra.mxu0 %v243
    %576 = vmatprep.subr.mxu0 0.0
    %577 = vmatpush1.msra.mxu0 %v244
    %578 = vmatprep.subr.mxu0 0.0
    %579 = vmatpush1.msra.mxu0 %v245
    %580 = vmatprep.subr.mxu0 0.0
    %581 = vmatpush1.msra.mxu0 %v246
    %582 = vmatprep.subr.mxu0 0.0
    %583 = vmatpush1.msra.mxu0 %v247
    %584 = vmatprep.subr.mxu0 0.0
    %585 = vmatpush1.msra.mxu0 %v248
    %586 = vmatprep.subr.mxu0 0.0
    %587 = vmatpush1.msra.mxu0 %v249
    %588 = vmatprep.subr.mxu0 0.0
    %589 = vmatpush1.msra.mxu0 %v250
    %590 = vmatprep.subr.mxu0 0.0
    %591 = vmatpush1.msra.mxu0 %v251
    %592 = vmatprep.subr.mxu0 0.0
    %593 = vmatpush1.msra.mxu0 %v252
    %594 = vmatprep.subr.mxu0 0.0
    %595 = vmatpush1.msra.mxu0 %v253
    %596 = vmatprep.subr.mxu0 0.0
    %597 = vmatpush1.msra.mxu0 %v254
    %598 = vmatprep.subr.mxu0 0.0
    %599 = vmatpush1.msra.mxu0 %v255
    %600 = vmatprep.subr.mxu0 0.0
    %601 = vmatpush1.msra.mxu0 %v256
    %602 = vmatprep.subr.mxu0 0.0
    %603 = vmatpush1.msra.mxu0 %v257
    %604 = vmatprep.subr.mxu0 0.0
    %605 = vmatpush1.msra.mxu0 %v258
    %606 = vmatprep.subr.mxu0 0.0
    %607 = vmatpush1.msra.mxu0 %v259
    %608 = vmatprep.subr.mxu0 0.0
    %609 = vmatpush1.msra.mxu0 %v260
    %610 = vmatprep.subr.mxu0 0.0
    %611 = vmatpush1.msra.mxu0 %v261
    %612 = vmatprep.subr.mxu0 0.0
    %613 = vmatpush1.msra.mxu0 %v262
    %614 = vmatprep.subr.mxu0 0.0
    %615 = vmatpush1.msra.mxu0 %v263
    %616 = vmatprep.subr.mxu0 0.0
    %617 = vmatpush1.msra.mxu0 %v264
    %618 = vmatprep.subr.mxu0 0.0
    %619 = vmatpush1.msra.mxu0 %v265
    %620 = vmatprep.subr.mxu0 0.0
    %621 = vmatpush1.msra.mxu0 %v266
    %622 = vmatprep.subr.mxu0 0.0
    %623 = vmatpush1.msra.mxu0 %v267
    %624 = vmatprep.subr.mxu0 0.0
    %625 = vmatpush1.msra.mxu0 %v268
    %626 = vmatprep.subr.mxu0 0.0
    %627 = vmatpush1.msra.mxu0 %v269
    %628 = vmatprep.subr.mxu0 0.0
    %629 = vmatpush1.msra.mxu0 %v270
    %630 = vmatprep.subr.mxu0 0.0
    %631 = vmatpush1.msra.mxu0 %v271
    %632 = vmatprep.mubr.f32.mxu0 %v99
    %633 = vmatmul.mubr.f32.gmra.mrb[0].mxu0 %v96
    %v634 = vpop.f32.mrb[0].mxu0
    %v635 = vadd.f32 %v560, %v634
    %v636 = vpop.f32.mrb[0].mxu0
    %637 = vmatprep.mubr.f32.mxu0 %v105
    %638 = vmatmul.mubr.f32.gmra.mrb[0].mxu0 %v102
    %v639 = vpop.f32.mrb[0].mxu0
    %v640 = vadd.f32 %v565, %v639
    %v641 = vpop.f32.mrb[0].mxu0
    %642 = vdwg.mxu0
    %643 = vmatprep.subr.mxu0 0.0
    %644 = vmatpush1.msra.mxu0 %v272
    %645 = vmatprep.subr.mxu0 0.0
    %646 = vmatpush1.msra.mxu0 %v273
    %647 = vmatprep.subr.mxu0 0.0
    %648 = vmatpush1.msra.mxu0 %v274
    %649 = vmatprep.subr.mxu0 0.0
    %650 = vmatpush1.msra.mxu0 %v275
    %651 = vmatprep.subr.mxu0 0.0
    %652 = vmatpush1.msra.mxu0 %v276
    %653 = vmatprep.subr.mxu0 0.0
    %654 = vmatpush1.msra.mxu0 %v277
    %655 = vmatprep.subr.mxu0 0.0
    %656 = vmatpush1.msra.mxu0 %v278
    %657 = vmatprep.subr.mxu0 0.0
    %658 = vmatpush1.msra.mxu0 %v279
    %659 = vmatprep.subr.mxu0 0.0
    %660 = vmatpush1.msra.mxu0 %v280
    %661 = vmatprep.subr.mxu0 0.0
    %662 = vmatpush1.msra.mxu0 %v281
    %663 = vmatprep.subr.mxu0 0.0
    %664 = vmatpush1.msra.mxu0 %v282
    %665 = vmatprep.subr.mxu0 0.0
    %666 = vmatpush1.msra.mxu0 %v283
    %667 = vmatprep.subr.mxu0 0.0
    %668 = vmatpush1.msra.mxu0 %v284
    %669 = vmatprep.subr.mxu0 0.0
    %670 = vmatpush1.msra.mxu0 %v285
    %671 = vmatprep.subr.mxu0 0.0
    %672 = vmatpush1.msra.mxu0 %v286
    %673 = vmatprep.subr.mxu0 0.0
    %674 = vmatpush1.msra.mxu0 %v287
    %675 = vmatprep.subr.mxu0 0.0
    %676 = vmatpush1.msra.mxu0 %v288
    %677 = vmatprep.subr.mxu0 0.0
    %678 = vmatpush1.msra.mxu0 %v289
    %679 = vmatprep.subr.mxu0 0.0
    %680 = vmatpush1.msra.mxu0 %v290
    %681 = vmatprep.subr.mxu0 0.0
    %682 = vmatpush1.msra.mxu0 %v291
    %683 = vmatprep.subr.mxu0 0.0
    %684 = vmatpush1.msra.mxu0 %v292
    %685 = vmatprep.subr.mxu0 0.0
    %686 = vmatpush1.msra.mxu0 %v293
    %687 = vmatprep.subr.mxu0 0.0
    %688 = vmatpush1.msra.mxu0 %v294
    %689 = vmatprep.subr.mxu0 0.0
    %690 = vmatpush1.msra.mxu0 %v295
    %691 = vmatprep.subr.mxu0 0.0
    %692 = vmatpush1.msra.mxu0 %v296
    %693 = vmatprep.subr.mxu0 0.0
    %694 = vmatpush1.msra.mxu0 %v297
    %695 = vmatprep.subr.mxu0 0.0
    %696 = vmatpush1.msra.mxu0 %v298
    %697 = vmatprep.subr.mxu0 0.0
    %698 = vmatpush1.msra.mxu0 %v299
    %699 = vmatprep.subr.mxu0 0.0
    %700 = vmatpush1.msra.mxu0 %v300
    %701 = vmatprep.subr.mxu0 0.0
    %702 = vmatpush1.msra.mxu0 %v301
    %703 = vmatprep.subr.mxu0 0.0
    %704 = vmatpush1.msra.mxu0 %v302
    %705 = vmatprep.subr.mxu0 0.0
    %706 = vmatpush1.msra.mxu0 %v303
    %707 = vmatprep.mubr.f32.mxu0 %v116
    %708 = vmatmul.mubr.f32.gmra.mrb[0].mxu0 %v113
    %v709 = vpop.f32.mrb[0].mxu0
    %v710 = vadd.f32 %v635, %v709
    %v711 = vpop.f32.mrb[0].mxu0
    %712 = vmatprep.mubr.f32.mxu0 %v122
    %713 = vmatmul.mubr.f32.gmra.mrb[0].mxu0 %v119
    %v714 = vpop.f32.mrb[0].mxu0
    %v715 = vadd.f32 %v640, %v714
    %v716 = vpop.f32.mrb[0].mxu0
    %717 = vdwg.mxu0
    %718 = vmatprep.subr.mxu0 0.0
    %719 = vmatpush1.msra.mxu0 %v304
    %720 = vmatprep.subr.mxu0 0.0
    %721 = vmatpush1.msra.mxu0 %v305
    %722 = vmatprep.subr.mxu0 0.0
    %723 = vmatpush1.msra.mxu0 %v306
    %724 = vmatprep.subr.mxu0 0.0
    %725 = vmatpush1.msra.mxu0 %v307
    %726 = vmatprep.subr.mxu0 0.0
    %727 = vmatpush1.msra.mxu0 %v308
    %728 = vmatprep.subr.mxu0 0.0
    %729 = vmatpush1.msra.mxu0 %v309
    %730 = vmatprep.subr.mxu0 0.0
    %731 = vmatpush1.msra.mxu0 %v310
    %732 = vmatprep.subr.mxu0 0.0
    %733 = vmatpush1.msra.mxu0 %v311
    %734 = vmatprep.subr.mxu0 0.0
    %735 = vmatpush1.msra.mxu0 %v312
    %736 = vmatprep.subr.mxu0 0.0
    %737 = vmatpush1.msra.mxu0 %v313
    %738 = vmatprep.subr.mxu0 0.0
    %739 = vmatpush1.msra.mxu0 %v314
    %740 = vmatprep.subr.mxu0 0.0
    %741 = vmatpush1.msra.mxu0 %v315
    %742 = vmatprep.subr.mxu0 0.0
    %743 = vmatpush1.msra.mxu0 %v316
    %744 = vmatprep.subr.mxu0 0.0
    %745 = vmatpush1.msra.mxu0 %v317
    %746 = vmatprep.subr.mxu0 0.0
    %747 = vmatpush1.msra.mxu0 %v318
    %748 = vmatprep.subr.mxu0 0.0
    %749 = vmatpush1.msra.mxu0 %v319
    %750 = vmatprep.subr.mxu0 0.0
    %751 = vmatpush1.msra.mxu0 %v320
    %752 = vmatprep.subr.mxu0 0.0
    %753 = vmatpush1.msra.mxu0 %v321
    %754 = vmatprep.subr.mxu0 0.0
    %755 = vmatpush1.msra.mxu0 %v322
    %756 = vmatprep.subr.mxu0 0.0
    %757 = vmatpush1.msra.mxu0 %v323
    %758 = vmatprep.subr.mxu0 0.0
    %759 = vmatpush1.msra.mxu0 %v324
    %760 = vmatprep.subr.mxu0 0.0
    %761 = vmatpush1.msra.mxu0 %v325
    %762 = vmatprep.subr.mxu0 0.0
    %763 = vmatpush1.msra.mxu0 %v326
    %764 = vmatprep.subr.mxu0 0.0
    %765 = vmatpush1.msra.mxu0 %v327
    %766 = vmatprep.subr.mxu0 0.0
    %767 = vmatpush1.msra.mxu0 %v328
    %768 = vmatprep.subr.mxu0 0.0
    %769 = vmatpush1.msra.mxu0 %v329
    %770 = vmatprep.subr.mxu0 0.0
    %771 = vmatpush1.msra.mxu0 %v330
    %772 = vmatprep.subr.mxu0 0.0
    %773 = vmatpush1.msra.mxu0 %v331
    %774 = vmatprep.subr.mxu0 0.0
    %775 = vmatpush1.msra.mxu0 %v332
    %776 = vmatprep.subr.mxu0 0.0
    %777 = vmatpush1.msra.mxu0 %v333
    %778 = vmatprep.subr.mxu0 0.0
    %779 = vmatpush1.msra.mxu0 %v334
    %780 = vmatprep.subr.mxu0 0.0
    %781 = vmatpush1.msra.mxu0 %v335
    %782 = vmatprep.mubr.f32.mxu0 %v133
    %783 = vmatmul.mubr.f32.gmra.mrb[0].mxu0 %v130
    %v784 = vpop.f32.mrb[0].mxu0
    %v785 = vadd.f32 %v710, %v784
    %v786 = vpop.f32.mrb[0].mxu0
    %787 = vmatprep.mubr.f32.mxu0 %v139
    %788 = vmatmul.mubr.f32.gmra.mrb[0].mxu0 %v136
    %v789 = vpop.f32.mrb[0].mxu0
    %v790 = vadd.f32 %v715, %v789
    %v791 = vpop.f32.mrb[0].mxu0
    %792 = vdwg.mxu0
    %v793 = vmax.f32 %v785, 0.0
    %v794 = vmax.f32 %v790, 0.0
    %v795 = vld [vmem:[#allocation3] sm:$0xff]
    %v796 = vadd.f32 %v793, %v795
    %v797 = vadd.f32 %v794, %v795
    %v798 = vrot.slane %v796, 4
    %v799 = vmax.f32 %v796, %v798
    %v800 = vrot.slane %v799, 2
    %v801 = vmax.f32 %v799, %v800
    %v802 = vrot.slane %v801, 1
    %v803 = vmax.f32 %v801, %v802
    %v804 = vrot.slane %v797, 4
    %v805 = vmax.f32 %v797, %v804
    %v806 = vrot.slane %v805, 2
    %v807 = vmax.f32 %v805, %v806
    %v808 = vrot.slane %v807, 1
    %v809 = vmax.f32 %v807, %v808
    %v810 = vld [vmem:[%s5] sm:$0x1]
    %v812 = vlaneseq
    %v813 = vshrl.u32 %v812, 7
    %v814 = vsub.s32 0, %v813
    %v815 = vrot.slane %v810, %v814
    %v817 = vmul.f32 %v803, %v815
    %v818 = vmul.f32 %v809, %v815
    %v821 = vrot.slane %v818, 7
    %vm822 = vcmask 1041409
    %v823 = vsel %vm822, %v821, %v817
    %vm825 = vcmask 1041408
    %v826 = vsel %vm825, %v823, 0.0
    %827 = vadd.xlane.f32.xlu0 %v826
    %v828 = vpop.xlane.xlu0 %827
    %v829 = vld [vmem:[%s3] sm:$0x3]
    %v830 = vld [vmem:[%s6] sm:$0x1]
    %v832 = vlaneseq
    %v833 = vshrl.u32 %v832, 7
    %v834 = vsub.s32 0, %v833
    %v835 = vrot.slane %v830, %v834
    %v837 = vmul.f32 %v829, %v835
    %v838 = vsel %vm825, %v837, 0.0
    %839 = vadd.xlane.f32.xlu0 %v838
    %v840 = vpop.xlane.xlu0 %839
    %v841 = vadd.f32 %v828, %v840
    %v842 = vld [vmem:[#allocation2] sm:$0x1]
    %v844 = vlaneseq
    %v845 = vshrl.u32 %v844, 7
    %v846 = vsub.s32 0, %v845
    %v847 = vrot.slane %v842, %v846
    %v849 = vadd.f32 %v841, %v847
    %vm850 = vcmask 1024
    %851 = vst.msk [vmem:[%s8] sm:$0x3] %vm850, %v849
    // Predicated region
    $region38: #{cnn_forward.1} parent=1 // pred_check
      _
    $region39: #{cnn_forward.1} parent=1 // pred_check_branch
      %853 = sbr.rel (0) target = $region41
    $region40: #{cnn_forward.1} parent=1 // pred_region
      _
    $region41: #{cnn_forward.1} parent=1 // pred_fallthru
      _
    // Predicated region
    $region42: #{cnn_forward.1} parent=1 // pred_check
      _
    $region43: #{cnn_forward.1} parent=1 // pred_check_branch
      %855 = sbr.rel (0) target = $region45
    $region44: #{cnn_forward.1} parent=1 // pred_region
      _
    $region45: #{cnn_forward.1} parent=1 // pred_fallthru
      _
    %856 = vsyncpa [#allocation4], 1

</llo_original>
